<compile_context>
chip_gen: v7x
topology: tpu7x:2x2x1
jax: 0.10.0
libtpu: 0.0.40
codegen_flags: <defaults>
</compile_context>

<pallas_src>
import jax
import jax.numpy as jnp
from jax import lax
from jax.experimental import pallas as pl
from jax.experimental.pallas import tpu as pltpu

EPS = 1e-5


def _cnn_layernorm_kernel(x_ref, g_ref, b_ref, o_ref):
    # x_ref: (bc_tile, F, t_tile) — normalize over axis 1 (F, the sublane axis).
    # g_ref / b_ref: (F, 1) affine params, broadcast over batch*channel & time.
    xf = x_ref[...].astype(jnp.float32)
    inv_f = 1.0 / xf.shape[1]
    s = jnp.sum(xf, axis=1, keepdims=True)          # (bc_tile, 1, t_tile)
    s2 = jnp.sum(xf * xf, axis=1, keepdims=True)    # single pass over the tile
    mean = s * inv_f
    var = jnp.maximum(s2 * inv_f - mean * mean, 0.0)   # biased var (nn.LayerNorm)
    inv = lax.rsqrt(var + EPS)
    g = g_ref[...].astype(jnp.float32)              # (F, 1): broadcast over lanes
    b = b_ref[...].astype(jnp.float32)
    # Re-read x for the apply pass so the tile can stay in its native dtype in
    # VMEM and be upcast per-vreg instead of holding a second full f32 copy.
    y = (x_ref[...].astype(jnp.float32) - mean) * inv * g + b
    o_ref[...] = y.astype(o_ref.dtype)


def _vmem_budget():
    """Return (target block bytes, scoped vmem_limit_bytes) per TPU generation."""
    try:
        cap = int(pltpu.get_tpu_info().vmem_capacity_bytes)
    except Exception:  # interpret mode / unknown backend
        cap = 0
    if cap >= 100 * 1024 * 1024:            # v5e / v6e: 128 MiB physical VMEM
        return 4 * 1024 * 1024, 64 * 1024 * 1024
    if cap >= 48 * 1024 * 1024:             # v7x: 64 MiB physical VMEM per TC
        return 8 * 1024 * 1024, 48 * 1024 * 1024
    return 4 * 1024 * 1024, 32 * 1024 * 1024   # conservative: legal everywhere


def _choose_tiles(bc, feats, time, itemsize, target_bytes):
    # --- time tile -----------------------------------------------------------
    # Keep full T (lane-dense, no masked stores) when the single-row slab fits
    # the budget or T is short; otherwise tile T in multiples of 128 lanes,
    # keeping >= 512 lanes so each per-row DMA chunk stays >= 2 KiB contiguous.
    row_bytes = max(1, feats * itemsize)
    if time <= 256 or time * row_bytes <= target_bytes:
        t_tile = time
    else:
        lanes_budget = max(1, target_bytes // row_bytes)
        lanes = min(time, max(512, lanes_budget))
        t_tile = (lanes // 128) * 128
        if t_tile <= 0 or t_tile >= time:
            t_tile = time

    # --- batch*channel tile --------------------------------------------------
    block_bytes = max(1, feats * t_tile * itemsize)
    bc_tile = max(1, min(bc, target_bytes // block_bytes))

    # Keep >= 2 grid steps along a parallel axis when possible so v7x's two
    # TensorCores both get work (harmless one extra ~0.35us step on v5e/v6e).
    if bc > 1 and bc_tile >= bc and t_tile >= time:
        bc_tile = pl.cdiv(bc, 2)

    return bc_tile, t_tile


def cnn_layer_norm(x, gamma, beta):
    """x: (B, C, n_feats, T) -> same shape, LayerNorm over the n_feats axis."""
    B, C, F_, T = x.shape
    BC = B * C
    x3 = x.reshape(BC, F_, T)              # leading-dim merge only: no data movement
    g2 = gamma.reshape(F_, 1).astype(jnp.float32)
    b2 = beta.reshape(F_, 1).astype(jnp.float32)

    itemsize = jnp.dtype(x.dtype).itemsize
    target_bytes, vmem_limit = _vmem_budget()
    bc_tile, t_tile = _choose_tiles(BC, F_, T, itemsize, target_bytes)
    grid = (pl.cdiv(BC, bc_tile), pl.cdiv(T, t_tile))

    cost = pl.CostEstimate(
        flops=8 * BC * F_ * T,
        transcendentals=BC * T,
        bytes_accessed=2 * BC * F_ * T * itemsize + 2 * F_ * 4,
    )

    y3 = pl.pallas_call(
        _cnn_layernorm_kernel,
        out_shape=jax.ShapeDtypeStruct((BC, F_, T), x.dtype),
        grid_spec=pltpu.PrefetchScalarGridSpec(
            num_scalar_prefetch=0,
            grid=grid,
            in_specs=[
                pl.BlockSpec((bc_tile, F_, t_tile), lambda i, j: (i, 0, j)),
                pl.BlockSpec((F_, 1), lambda i, j: (0, 0)),
                pl.BlockSpec((F_, 1), lambda i, j: (0, 0)),
            ],
            out_specs=pl.BlockSpec((bc_tile, F_, t_tile), lambda i, j: (i, 0, j)),
        ),
        compiler_params=pltpu.CompilerParams(
            dimension_semantics=("parallel", "parallel"),
            vmem_limit_bytes=vmem_limit,
        ),
        cost_estimate=cost,
    )(x3, g2, b2)

    return y3.reshape(B, C, F_, T)


def _reference(x, gamma, beta):
    xt = jnp.transpose(x, (0, 1, 3, 2)).astype(jnp.float32)
    mean = jnp.mean(xt, axis=-1, keepdims=True)
    var = jnp.mean((xt - mean) ** 2, axis=-1, keepdims=True)
    y = (xt - mean) / jnp.sqrt(var + EPS) * gamma + beta
    return jnp.transpose(y, (0, 1, 3, 2)).astype(x.dtype)


if __name__ == "__main__":
    key = jax.random.PRNGKey(0)

    def run_case(B, C, n_feats, T, k):
        kx, kg, kb = jax.random.split(k, 3)
        x = jax.random.normal(kx, (B, C, n_feats, T), dtype=jnp.float32)
        # nn.LayerNorm default init is ones/zeros; perturb to exercise the affine.
        gamma = 1.0 + 0.1 * jax.random.normal(kg, (n_feats,), dtype=jnp.float32)
        beta = 0.1 * jax.random.normal(kb, (n_feats,), dtype=jnp.float32)
        out = jax.block_until_ready(cnn_layer_norm(x, gamma, beta))
        ref = _reference(x, gamma, beta)
        assert out.shape == x.shape
        assert jnp.allclose(out, ref, atol=1e-5, rtol=1e-5), (
            f"mismatch vs reference for shape {(B, C, n_feats, T)}"
        )

    k1, k2 = jax.random.split(key)
    # Main small case (typical CNNLayerNorm usage).
    run_case(2, 4, 32, 16, k1)
    # Ragged-grid case: BC=3 is prime -> exercises the cdiv grid / partial tiles.
    run_case(3, 1, 32, 48, k2)
    print("KERNEL_OK")
</pallas_src>

<mosaic_0001>
module attributes {stable_mosaic.version = 11 : i64} {
  func.func @_cnn_layernorm_kernel(%arg0: i32, %arg1: i32, %arg2: memref<4x32x16xf32, #tpu.memory_space<vmem>>, %arg3: memref<32x1xf32, #tpu.memory_space<vmem>>, %arg4: memref<32x1xf32, #tpu.memory_space<vmem>>, %arg5: memref<4x32x16xf32, #tpu.memory_space<vmem>>) attributes {dimension_semantics = [#tpu.dimension_semantics<parallel>, #tpu.dimension_semantics<parallel>], iteration_bounds = array<i64: 2, 1>, scalar_prefetch = 0 : i64, scratch_operands = 0 : i64, tpu.core_type = #tpu.core_type<tc>, window_params = [{transform_indices = @transform_0, window_bounds = array<i64: 4, 32, 16>}, {pipeline_mode = #tpu.pipeline_mode<synchronous>, transform_indices = @transform_1, window_bounds = array<i64: 32, 1>}, {pipeline_mode = #tpu.pipeline_mode<synchronous>, transform_indices = @transform_2, window_bounds = array<i64: 32, 1>}, {transform_indices = @transform_3, window_bounds = array<i64: 4, 32, 16>}]} {
    %c0 = arith.constant 0 : index
    %c0_0 = arith.constant 0 : index
    %c0_1 = arith.constant 0 : index
    %0 = vector.load %arg2[%c0, %c0_0, %c0_1] : memref<4x32x16xf32, #tpu.memory_space<vmem>>, vector<4x32x16xf32>
    %cst = arith.constant dense<0.000000e+00> : vector<4x16xf32>
    %1 = vector.multi_reduction <add>, %0, %cst [1] : vector<4x32x16xf32> to vector<4x16xf32>
    %2 = vector.shape_cast %1 : vector<4x16xf32> to vector<4x1x16xf32>
    %3 = arith.mulf %0, %0 : vector<4x32x16xf32>
    %cst_2 = arith.constant dense<0.000000e+00> : vector<4x16xf32>
    %4 = vector.multi_reduction <add>, %3, %cst_2 [1] : vector<4x32x16xf32> to vector<4x16xf32>
    %5 = vector.shape_cast %4 : vector<4x16xf32> to vector<4x1x16xf32>
    %cst_3 = arith.constant 3.125000e-02 : f32
    %6 = vector.broadcast %cst_3 : f32 to vector<4x1x16xf32>
    %7 = arith.mulf %2, %6 : vector<4x1x16xf32>
    %cst_4 = arith.constant 3.125000e-02 : f32
    %8 = vector.broadcast %cst_4 : f32 to vector<4x1x16xf32>
    %9 = arith.mulf %5, %8 : vector<4x1x16xf32>
    %10 = arith.mulf %7, %7 : vector<4x1x16xf32>
    %11 = arith.subf %9, %10 : vector<4x1x16xf32>
    %cst_5 = arith.constant 0.000000e+00 : f32
    %12 = vector.broadcast %cst_5 : f32 to vector<4x1x16xf32>
    %13 = arith.maximumf %11, %12 : vector<4x1x16xf32>
    %cst_6 = arith.constant 9.99999974E-6 : f32
    %14 = vector.broadcast %cst_6 : f32 to vector<4x1x16xf32>
    %15 = arith.addf %13, %14 : vector<4x1x16xf32>
    %16 = math.rsqrt %15 : vector<4x1x16xf32>
    %c0_7 = arith.constant 0 : index
    %c0_8 = arith.constant 0 : index
    %17 = vector.load %arg3[%c0_7, %c0_8] : memref<32x1xf32, #tpu.memory_space<vmem>>, vector<32x1xf32>
    %c0_9 = arith.constant 0 : index
    %c0_10 = arith.constant 0 : index
    %18 = vector.load %arg4[%c0_9, %c0_10] : memref<32x1xf32, #tpu.memory_space<vmem>>, vector<32x1xf32>
    %c0_11 = arith.constant 0 : index
    %c0_12 = arith.constant 0 : index
    %c0_13 = arith.constant 0 : index
    %19 = vector.load %arg2[%c0_11, %c0_12, %c0_13] : memref<4x32x16xf32, #tpu.memory_space<vmem>>, vector<4x32x16xf32>
    %20 = vector.broadcast %7 : vector<4x1x16xf32> to vector<4x32x16xf32>
    %21 = arith.subf %19, %20 : vector<4x32x16xf32>
    %22 = vector.broadcast %16 : vector<4x1x16xf32> to vector<4x32x16xf32>
    %23 = arith.mulf %21, %22 : vector<4x32x16xf32>
    %24 = vector.shape_cast %17 : vector<32x1xf32> to vector<1x32x1xf32>
    %25 = vector.broadcast %24 : vector<1x32x1xf32> to vector<4x32x16xf32>
    %26 = arith.mulf %23, %25 : vector<4x32x16xf32>
    %27 = vector.shape_cast %18 : vector<32x1xf32> to vector<1x32x1xf32>
    %28 = vector.broadcast %27 : vector<1x32x1xf32> to vector<4x32x16xf32>
    %29 = arith.addf %26, %28 : vector<4x32x16xf32>
    %c0_14 = arith.constant 0 : index
    %c0_15 = arith.constant 0 : index
    %c0_16 = arith.constant 0 : index
    %30 = vector.load %arg5[%c0_14, %c0_15, %c0_16] : memref<4x32x16xf32, #tpu.memory_space<vmem>>, vector<4x32x16xf32>
    tpu.vector_store %arg5[%c0_14, %c0_15, %c0_16], %29 {strides = array<i32>} : memref<4x32x16xf32, #tpu.memory_space<vmem>>, vector<4x32x16xf32>,
    return
  }
  func.func @transform_0(%arg0: i32, %arg1: i32) -> (i32, i32, i32) {
    %c0_i32 = arith.constant 0 : i32
    %c0_i32_0 = arith.constant 0 : i32
    return %arg0, %c0_i32, %arg1 : i32, i32, i32
  }
  func.func @transform_1(%arg0: i32, %arg1: i32) -> (i32, i32) {
    %c0_i32 = arith.constant 0 : i32
    %c0_i32_0 = arith.constant 0 : i32
    %c0_i32_1 = arith.constant 0 : i32
    return %c0_i32, %c0_i32_0 : i32, i32
  }
  func.func @transform_2(%arg0: i32, %arg1: i32) -> (i32, i32) {
    %c0_i32 = arith.constant 0 : i32
    %c0_i32_0 = arith.constant 0 : i32
    %c0_i32_1 = arith.constant 0 : i32
    return %c0_i32, %c0_i32_0 : i32, i32
  }
  func.func @transform_3(%arg0: i32, %arg1: i32) -> (i32, i32, i32) {
    %c0_i32 = arith.constant 0 : i32
    %c0_i32_0 = arith.constant 0 : i32
    return %arg0, %c0_i32, %arg1 : i32, i32, i32
  }
}

</mosaic_0001>

<llo_original>
// kernel: tpu_custom_call.1
$region0: #{tpu_custom_call.1}
  #allocation0 [shape = 'u32[]', space=smem, size = 0x4, offset = 0x4, fixed_abs, tag = 'smem constant byte address 0x4 - core index']
  #allocation1 [shape = 'u32[144,128]{1,0:T(1,128)}', space=vmem, size = 0x12000, scoped, tag = 'internal scratch']
  %s0 = inlined_call_operand.vmem [shape: f32[8,32,16], index: 0, kind: input, shape index: {}]
  %s1 = inlined_call_operand.vmem [shape: f32[32,1], index: 1, kind: input, shape index: {}]
  %s2 = inlined_call_operand.vmem [shape: f32[32,1], index: 2, kind: input, shape index: {}]
  %s3 = inlined_call_operand.vmem [shape: f32[8,32,16], index: 3, kind: output, shape index: {}]
  %s4 = sld [smem:[#allocation0]]
  $region45: #{tpu_custom_call.1} parent=0
    _
  %s6 = ssub.s32 1, %s4
  %s7 = scalar_select 0, %s6, %s4
  loop: start=0, step=1, limit=4
  $region2: #{tpu_custom_call.1} parent=0 // loop_pre_header
    _
  $region3: #{tpu_custom_call.1} parent=0 // loop_header
    %s9 = sphi 0, %s13
    %p10 = scmp.ge.s32.totalorder %s9, 4
    %s16 = sphi 0, %s28
    %s17 = sphi 0, %s24
    %s18 = sphi 0, %s16
    %s19 = sphi 0, %s17
    %s20 = sphi 0, %s18
    %s21 = sphi 0, %s19
    %s33 = sphi 0, %s35
    %s36 = sphi 0, %s33
    %s37 = sphi 0, %s36
    %s53 = sphi 0, %s37
    %s57 = sphi 0, %s57
    %s59 = sphi 0, %s57
    %s60 = sphi 0, %s59
    %s74 = sphi 0, %s60
    %s78 = sphi 0, %s78
    %s80 = sphi 0, %s78
    %s81 = sphi 0, %s80
    %s95 = sphi 0, %s81
    %s103 = sphi 0, %s105
    %s106 = sphi 0, %s103
    %s107 = sphi 0, %s106
    %s123 = sphi 0, %s107
  $region4: #{tpu_custom_call.1} parent=0 // loop_header_branch
    %12 = sbr.rel (%p10) target = $region8
  $region5: #{tpu_custom_call.1} parent=0 // loop_body
    %s14 = ssub.s32 %s9, 1
    %s15 = ssub.s32 %s9, 2
    %s22 = sadd.s32 1, %s17
    %p23 = scmp.ge.s32.totalorder %s22, 1
    %s24 = scalar_select %p23, 0, %s22
    %s25 = sadd.s32 1, %s16
    %s26 = scalar_select %p23, %s25, %s16
    %p27 = scmp.ge.s32.totalorder %s26, 2
    %s28 = scalar_select %p27, 0, %s26
    %s29 = ssub.s32 %s16, %s28
    %s30 = ssub.s32 %s17, %s24
    %s31 = sor.u32 %s29, %s30
    %p32 = scmp.eq.s32.totalorder %s31, 0
    %s34 = sadd.s32 %s33, 1
    %s35 = scalar_select %p32, %s33, %s34
    %p38 = pneg %p32
    %p39 = scmp.eq.s32.totalorder %s9, 1
    %p40 = por %p38, %p39
    %p41 = scmp.ne.s32.totalorder %s33, %s36
    %p42 = scmp.eq.s32.totalorder %s9, 0
    %p43 = por %p41, %p42
    %p44 = scmp.ne.s32.totalorder %s33, %s36
    %p45 = scmp.eq.s32.totalorder %s14, 1
    %p46 = por %p44, %p45
    %p47 = scmp.ne.s32.totalorder %s36, %s37
    %p48 = scmp.eq.s32.totalorder %s14, 0
    %p49 = por %p47, %p48
    %p50 = scmp.ne.s32.totalorder %s36, %s37
    %p51 = scmp.eq.s32.totalorder %s15, 1
    %p52 = por %p50, %p51
    %p54 = scmp.ne.s32.totalorder %s37, %s53
    %p55 = scmp.eq.s32.totalorder %s15, 0
    %p56 = por %p54, %p55
    %s58 = sadd.s32 %s57, 1
    %p61 = scmp.eq.s32.totalorder %s9, 1
    %p62 = scmp.ne.s32.totalorder %s57, %s59
    %p63 = scmp.eq.s32.totalorder %s9, 0
    %p64 = por %p62, %p63
    %p65 = scmp.ne.s32.totalorder %s57, %s59
    %p66 = scmp.eq.s32.totalorder %s14, 1
    %p67 = por %p65, %p66
    %p68 = scmp.ne.s32.totalorder %s59, %s60
    %p69 = scmp.eq.s32.totalorder %s14, 0
    %p70 = por %p68, %p69
    %p71 = scmp.ne.s32.totalorder %s59, %s60
    %p72 = scmp.eq.s32.totalorder %s15, 1
    %p73 = por %p71, %p72
    %p75 = scmp.ne.s32.totalorder %s60, %s74
    %p76 = scmp.eq.s32.totalorder %s15, 0
    %p77 = por %p75, %p76
    %s79 = sadd.s32 %s78, 1
    %p82 = scmp.eq.s32.totalorder %s9, 1
    %p83 = scmp.ne.s32.totalorder %s78, %s80
    %p84 = scmp.eq.s32.totalorder %s9, 0
    %p85 = por %p83, %p84
    %p86 = scmp.ne.s32.totalorder %s78, %s80
    %p87 = scmp.eq.s32.totalorder %s14, 1
    %p88 = por %p86, %p87
    %p89 = scmp.ne.s32.totalorder %s80, %s81
    %p90 = scmp.eq.s32.totalorder %s14, 0
    %p91 = por %p89, %p90
    %p92 = scmp.ne.s32.totalorder %s80, %s81
    %p93 = scmp.eq.s32.totalorder %s15, 1
    %p94 = por %p92, %p93
    %p96 = scmp.ne.s32.totalorder %s81, %s95
    %p97 = scmp.eq.s32.totalorder %s15, 0
    %p98 = por %p96, %p97
    %s99 = ssub.s32 %s16, %s28
    %s100 = ssub.s32 %s17, %s24
    %s101 = sor.u32 %s99, %s100
    %p102 = scmp.eq.s32.totalorder %s101, 0
    %s104 = sadd.s32 %s103, 1
    %s105 = scalar_select %p102, %s103, %s104
    %p108 = pneg %p102
    %p109 = scmp.eq.s32.totalorder %s9, 1
    %p110 = por %p108, %p109
    %p111 = scmp.ne.s32.totalorder %s103, %s106
    %p112 = scmp.eq.s32.totalorder %s9, 0
    %p113 = por %p111, %p112
    %p114 = scmp.ne.s32.totalorder %s103, %s106
    %p115 = scmp.eq.s32.totalorder %s14, 1
    %p116 = por %p114, %p115
    %p117 = scmp.ne.s32.totalorder %s106, %s107
    %p118 = scmp.eq.s32.totalorder %s14, 0
    %p119 = por %p117, %p118
    %p120 = scmp.ne.s32.totalorder %s106, %s107
    %p121 = scmp.eq.s32.totalorder %s15, 1
    %p122 = por %p120, %p121
    %p124 = scmp.ne.s32.totalorder %s107, %s123
    %p125 = scmp.eq.s32.totalorder %s15, 0
    %p126 = por %p124, %p125
    %p127 = scmp.le.s32.totalorder 1, %s9
    %p128 = scmp.lt.s32.totalorder %s9, 3
    %p129 = pnand %p127, %p128
    %p130 = pneg %p129
    // Predicated region
    $region9: #{tpu_custom_call.1} parent=5 // pred_check
      _
    $region10: #{tpu_custom_call.1} parent=5 // pred_check_branch
      %132 = sbr.rel (%p129) target = $region12
    $region11: #{tpu_custom_call.1} parent=5 // pred_region
      %s133 = ssub.s32 %s9, 1
      // Predicated region
      $region13: #{tpu_custom_call.1} parent=11 // pred_check
        %p134 = pneg %p70
      $region14: #{tpu_custom_call.1} parent=11 // pred_check_branch
        %136 = sbr.rel (%p134) target = $region16
      $region15: #{tpu_custom_call.1} parent=11 // pred_region
        _
      $region16: #{tpu_custom_call.1} parent=11 // pred_fallthru
        _
      // Predicated region
      $region17: #{tpu_custom_call.1} parent=11 // pred_check
        %p137 = pneg %p91
      $region18: #{tpu_custom_call.1} parent=11 // pred_check_branch
        %139 = sbr.rel (%p137) target = $region20
      $region19: #{tpu_custom_call.1} parent=11 // pred_region
        _
      $region20: #{tpu_custom_call.1} parent=11 // pred_fallthru
        _
    $region12: #{tpu_custom_call.1} parent=5 // pred_fallthru
      _
    %p140 = scmp.lt.s32.totalorder %s9, 2
    // Predicated region
    $region21: #{tpu_custom_call.1} parent=5 // pred_check
      %p141 = pneg %p140
    $region22: #{tpu_custom_call.1} parent=5 // pred_check_branch
      %143 = sbr.rel (%p141) target = $region24
    $region23: #{tpu_custom_call.1} parent=5 // pred_region
      // Predicated region
      $region25: #{tpu_custom_call.1} parent=23 // pred_check
        %p144 = pneg %p43
      $region26: #{tpu_custom_call.1} parent=23 // pred_check_branch
        %146 = sbr.rel (%p144) target = $region28
      $region27: #{tpu_custom_call.1} parent=23 // pred_region
        %s147 = smul.u32 4, %s16
        %p148 = scmp.lt.s32.totalorder %s147, 7
        %s149 = scalar_select %p148, %s147, 7
        %p150 = scmp.lt.s32.totalorder %s17, 0
        %s151 = scalar_select %p150, %s17, 0
        %s152 = smul.addr %s149, 4
        %s153 = sadd.s32 %s151, %s152
        %s154 = smul.addr %s153, 8
        %s155 = scalar_lea.vmem %s0, %s154
        %s156 = smul.u32 4, %s16
      $region28: #{tpu_custom_call.1} parent=23 // pred_fallthru
        _
    $region24: #{tpu_custom_call.1} parent=5 // pred_fallthru
      _
    %p157 = scmp.le.s32.totalorder 1, %s9
    %p158 = scmp.lt.s32.totalorder %s9, 3
    %p159 = pnand %p157, %p158
    %p160 = pneg %p159
    // Predicated region
    $region29: #{tpu_custom_call.1} parent=5 // pred_check
      _
    $region30: #{tpu_custom_call.1} parent=5 // pred_check_branch
      %162 = sbr.rel (%p159) target = $region32
    $region31: #{tpu_custom_call.1} parent=5 // pred_region
      %s163 = ssub.s32 %s9, 1
      %s164 = smul.u32 4, %s18
      %p165 = scmp.lt.s32.totalorder %s164, 7
      %s166 = scalar_select %p165, %s164, 7
      %p167 = scmp.lt.s32.totalorder %s19, 0
      %s168 = scalar_select %p167, %s19, 0
      %s169 = smul.addr %s166, 4
      %s170 = sadd.s32 %s168, %s169
      %s171 = smul.addr %s170, 8
      %s172 = scalar_lea.vmem %s0, %s171
      %p173 = pneg %p49
      %p174 = pneg %p46
      %p175 = pneg %p70
      %p176 = pneg %p67
      %p177 = pneg %p91
      %p178 = pneg %p88
      %p179 = pneg %p119
      %p180 = pneg %p116
      %s181 = smul.u32 4, %s18
      %p182 = scmp.lt.s32.totalorder %s181, 7
      %s183 = scalar_select %p182, %s181, 7
      %p184 = scmp.lt.s32.totalorder %s19, 0
      %s185 = scalar_select %p184, %s19, 0
      %s186 = smul.addr %s183, 4
      %s187 = sadd.s32 %s185, %s186
      %s188 = smul.addr %s187, 8
      %s189 = scalar_lea.vmem %s3, %s188
      %s190 = smul.u32 4, %s18
      %p191 = scmp.lt.s32.totalorder %s190, 7
      %s192 = scalar_select %p191, %s190, 7
      %p193 = scmp.lt.s32.totalorder %s19, 0
      %s194 = scalar_select %p193, %s19, 0
      %s195 = smul.addr %s192, 4
      %s196 = sadd.s32 %s194, %s195
      %s197 = smul.addr %s196, 8
      %s198 = scalar_lea.vmem %s0, %s197
      %s199 = smul.u32 4, %s18
      %s200 = smul.u32 4, %s18
      %p201 = scmp.lt.s32.totalorder %s200, 7
      %s202 = scalar_select %p201, %s200, 7
      %p203 = scmp.lt.s32.totalorder %s19, 0
      %s204 = scalar_select %p203, %s19, 0
      %s205 = smul.addr %s202, 4
      %s206 = sadd.s32 %s204, %s205
      %s207 = smul.addr %s206, 8
      %s208 = scalar_lea.vmem %s3, %s207
      %s209 = smul.u32 4, %s18
      %v210 = vld [vmem:[%s198] sm:$0xff]
      %v211 = vld [vmem:[%s198 + $0x8] sm:$0xff]
      %v212 = vld [vmem:[%s198 + $0x10] sm:$0xff]
      %v213 = vld [vmem:[%s198 + $0x18] sm:$0xff]
      %v214 = vld [vmem:[%s198 + $0x20] sm:$0xff]
      %v215 = vld [vmem:[%s198 + $0x28] sm:$0xff]
      %v216 = vld [vmem:[%s198 + $0x30] sm:$0xff]
      %v217 = vld [vmem:[%s198 + $0x38] sm:$0xff]
      %v218 = vld [vmem:[%s198 + $0x40] sm:$0xff]
      %v219 = vld [vmem:[%s198 + $0x48] sm:$0xff]
      %v220 = vld [vmem:[%s198 + $0x50] sm:$0xff]
      %v221 = vld [vmem:[%s198 + $0x58] sm:$0xff]
      %v222 = vld [vmem:[%s198 + $0x60] sm:$0xff]
      %v223 = vld [vmem:[%s198 + $0x68] sm:$0xff]
      %v224 = vld [vmem:[%s198 + $0x70] sm:$0xff]
      %v225 = vld [vmem:[%s198 + $0x78] sm:$0xff]
      %vm226 = vcmask 130048
      %v227 = vsel %vm226, %v210, 0.0
      %v228 = vsel %vm226, %v211, 0.0
      %v229 = vadd.f32 %v227, %v228
      %v230 = vsel %vm226, %v212, 0.0
      %v231 = vadd.f32 %v229, %v230
      %v232 = vsel %vm226, %v213, 0.0
      %v233 = vadd.f32 %v231, %v232
      %v234 = vrot.slane %v233, 4
      %v235 = vadd.f32 %v233, %v234
      %v236 = vrot.slane %v235, 2
      %v237 = vadd.f32 %v235, %v236
      %v238 = vrot.slane %v237, 1
      %v239 = vadd.f32 %v237, %v238
      %v240 = vsel %vm226, %v214, 0.0
      %v241 = vsel %vm226, %v215, 0.0
      %v242 = vadd.f32 %v240, %v241
      %v243 = vsel %vm226, %v216, 0.0
      %v244 = vadd.f32 %v242, %v243
      %v245 = vsel %vm226, %v217, 0.0
      %v246 = vadd.f32 %v244, %v245
      %v247 = vrot.slane %v246, 4
      %v248 = vadd.f32 %v246, %v247
      %v249 = vrot.slane %v248, 2
      %v250 = vadd.f32 %v248, %v249
      %v251 = vrot.slane %v250, 1
      %v252 = vadd.f32 %v250, %v251
      %v253 = vsel %vm226, %v218, 0.0
      %v254 = vsel %vm226, %v219, 0.0
      %v255 = vadd.f32 %v253, %v254
      %v256 = vsel %vm226, %v220, 0.0
      %v257 = vadd.f32 %v255, %v256
      %v258 = vsel %vm226, %v221, 0.0
      %v259 = vadd.f32 %v257, %v258
      %v260 = vrot.slane %v259, 4
      %v261 = vadd.f32 %v259, %v260
      %v262 = vrot.slane %v261, 2
      %v263 = vadd.f32 %v261, %v262
      %v264 = vrot.slane %v263, 1
      %v265 = vadd.f32 %v263, %v264
      %v266 = vsel %vm226, %v222, 0.0
      %v267 = vsel %vm226, %v223, 0.0
      %v268 = vadd.f32 %v266, %v267
      %v269 = vsel %vm226, %v224, 0.0
      %v270 = vadd.f32 %v268, %v269
      %v271 = vsel %vm226, %v225, 0.0
      %v272 = vadd.f32 %v270, %v271
      %v273 = vrot.slane %v272, 4
      %v274 = vadd.f32 %v272, %v273
      %v275 = vrot.slane %v274, 2
      %v276 = vadd.f32 %v274, %v275
      %v277 = vrot.slane %v276, 1
      %v278 = vadd.f32 %v276, %v277
      %v279 = vmul.f32 %v210, %v210
      %v280 = vmul.f32 %v211, %v211
      %v281 = vmul.f32 %v212, %v212
      %v282 = vmul.f32 %v213, %v213
      %v283 = vmul.f32 %v214, %v214
      %v284 = vmul.f32 %v215, %v215
      %v285 = vmul.f32 %v216, %v216
      %v286 = vmul.f32 %v217, %v217
      %v287 = vmul.f32 %v218, %v218
      %v288 = vmul.f32 %v219, %v219
      %v289 = vmul.f32 %v220, %v220
      %v290 = vmul.f32 %v221, %v221
      %v291 = vmul.f32 %v222, %v222
      %v292 = vmul.f32 %v223, %v223
      %v293 = vmul.f32 %v224, %v224
      %v294 = vmul.f32 %v225, %v225
      %v295 = vsel %vm226, %v279, 0.0
      %v296 = vsel %vm226, %v280, 0.0
      %v297 = vadd.f32 %v295, %v296
      %v298 = vsel %vm226, %v281, 0.0
      %v299 = vadd.f32 %v297, %v298
      %v300 = vsel %vm226, %v282, 0.0
      %v301 = vadd.f32 %v299, %v300
      %v302 = vrot.slane %v301, 4
      %v303 = vadd.f32 %v301, %v302
      %v304 = vrot.slane %v303, 2
      %v305 = vadd.f32 %v303, %v304
      %v306 = vrot.slane %v305, 1
      %v307 = vadd.f32 %v305, %v306
      %v308 = vsel %vm226, %v283, 0.0
      %v309 = vsel %vm226, %v284, 0.0
      %v310 = vadd.f32 %v308, %v309
      %v311 = vsel %vm226, %v285, 0.0
      %v312 = vadd.f32 %v310, %v311
      %v313 = vsel %vm226, %v286, 0.0
      %v314 = vadd.f32 %v312, %v313
      %v315 = vrot.slane %v314, 4
      %v316 = vadd.f32 %v314, %v315
      %v317 = vrot.slane %v316, 2
      %v318 = vadd.f32 %v316, %v317
      %v319 = vrot.slane %v318, 1
      %v320 = vadd.f32 %v318, %v319
      %v321 = vsel %vm226, %v287, 0.0
      %v322 = vsel %vm226, %v288, 0.0
      %v323 = vadd.f32 %v321, %v322
      %v324 = vsel %vm226, %v289, 0.0
      %v325 = vadd.f32 %v323, %v324
      %v326 = vsel %vm226, %v290, 0.0
      %v327 = vadd.f32 %v325, %v326
      %v328 = vrot.slane %v327, 4
      %v329 = vadd.f32 %v327, %v328
      %v330 = vrot.slane %v329, 2
      %v331 = vadd.f32 %v329, %v330
      %v332 = vrot.slane %v331, 1
      %v333 = vadd.f32 %v331, %v332
      %v334 = vsel %vm226, %v291, 0.0
      %v335 = vsel %vm226, %v292, 0.0
      %v336 = vadd.f32 %v334, %v335
      %v337 = vsel %vm226, %v293, 0.0
      %v338 = vadd.f32 %v336, %v337
      %v339 = vsel %vm226, %v294, 0.0
      %v340 = vadd.f32 %v338, %v339
      %v341 = vrot.slane %v340, 4
      %v342 = vadd.f32 %v340, %v341
      %v343 = vrot.slane %v342, 2
      %v344 = vadd.f32 %v342, %v343
      %v345 = vrot.slane %v344, 1
      %v346 = vadd.f32 %v344, %v345
      %v347 = vmul.f32 %v239, 0.03125
      %v348 = vmul.f32 %v252, 0.03125
      %v349 = vmul.f32 %v265, 0.03125
      %v350 = vmul.f32 %v278, 0.03125
      %v351 = vmul.f32 %v307, 0.03125
      %v352 = vmul.f32 %v320, 0.03125
      %v353 = vmul.f32 %v333, 0.03125
      %v354 = vmul.f32 %v346, 0.03125
      %v355 = vmul.f32 %v347, %v347
      %v356 = vmul.f32 %v348, %v348
      %v357 = vmul.f32 %v349, %v349
      %v358 = vmul.f32 %v350, %v350
      %v359 = vsub.f32 %v351, %v355
      %v360 = vsub.f32 %v352, %v356
      %v361 = vsub.f32 %v353, %v357
      %v362 = vsub.f32 %v354, %v358
      %v363 = vmax.f32 %v359, 0.0
      %v364 = vmax.f32 %v360, 0.0
      %v365 = vmax.f32 %v361, 0.0
      %v366 = vmax.f32 %v362, 0.0
      %v367 = vadd.f32 %v363, 1e-05
      %v368 = vadd.f32 %v364, 1e-05
      %v369 = vadd.f32 %v365, 1e-05
      %v370 = vadd.f32 %v366, 1e-05
      %v371 = vrsqrt.pop %v367
      %v372 = vrsqrt.pop %v368
      %v373 = vrsqrt.pop %v369
      %v374 = vrsqrt.pop %v370
      %v375 = vld [vmem:[%s1] sm:$0xff]
      %v376 = vld [vmem:[%s1 + $0x8] sm:$0xff]
      %v377 = vld [vmem:[%s1 + $0x10] sm:$0xff]
      %v378 = vld [vmem:[%s1 + $0x18] sm:$0xff]
      %v379 = vld [vmem:[%s2] sm:$0xff]
      %v380 = vld [vmem:[%s2 + $0x8] sm:$0xff]
      %v381 = vld [vmem:[%s2 + $0x10] sm:$0xff]
      %v382 = vld [vmem:[%s2 + $0x18] sm:$0xff]
      %v383 = vsub.f32 %v210, %v347
      %v384 = vsub.f32 %v211, %v347
      %v385 = vsub.f32 %v212, %v347
      %v386 = vsub.f32 %v213, %v347
      %v387 = vsub.f32 %v214, %v348
      %v388 = vsub.f32 %v215, %v348
      %v389 = vsub.f32 %v216, %v348
      %v390 = vsub.f32 %v217, %v348
      %v391 = vsub.f32 %v218, %v349
      %v392 = vsub.f32 %v219, %v349
      %v393 = vsub.f32 %v220, %v349
      %v394 = vsub.f32 %v221, %v349
      %v395 = vsub.f32 %v222, %v350
      %v396 = vsub.f32 %v223, %v350
      %v397 = vsub.f32 %v224, %v350
      %v398 = vsub.f32 %v225, %v350
      %v399 = vmul.f32 %v383, %v371
      %v400 = vmul.f32 %v384, %v371
      %v401 = vmul.f32 %v385, %v371
      %v402 = vmul.f32 %v386, %v371
      %v403 = vmul.f32 %v387, %v372
      %v404 = vmul.f32 %v388, %v372
      %v405 = vmul.f32 %v389, %v372
      %v406 = vmul.f32 %v390, %v372
      %v407 = vmul.f32 %v391, %v373
      %v408 = vmul.f32 %v392, %v373
      %v409 = vmul.f32 %v393, %v373
      %v410 = vmul.f32 %v394, %v373
      %v411 = vmul.f32 %v395, %v374
      %v412 = vmul.f32 %v396, %v374
      %v413 = vmul.f32 %v397, %v374
      %v414 = vmul.f32 %v398, %v374
      %416 = vset.pattern.permute.xlu0 0
      %417 = vperm.xlu0 %416, %v375
      %v418 = vpop.permute.xlu0 %417
      %421 = vset.pattern.permute.xlu0 0
      %422 = vperm.xlu0 %421, %v376
      %v423 = vpop.permute.xlu0 %422
      %426 = vset.pattern.permute.xlu0 0
      %427 = vperm.xlu0 %426, %v377
      %v428 = vpop.permute.xlu0 %427
      %431 = vset.pattern.permute.xlu0 0
      %432 = vperm.xlu0 %431, %v378
      %v433 = vpop.permute.xlu0 %432
      %v435 = vmul.f32 %v399, %v418
      %v436 = vmul.f32 %v400, %v423
      %v437 = vmul.f32 %v401, %v428
      %v438 = vmul.f32 %v402, %v433
      %v439 = vmul.f32 %v403, %v418
      %v440 = vmul.f32 %v404, %v423
      %v441 = vmul.f32 %v405, %v428
      %v442 = vmul.f32 %v406, %v433
      %v443 = vmul.f32 %v407, %v418
      %v444 = vmul.f32 %v408, %v423
      %v445 = vmul.f32 %v409, %v428
      %v446 = vmul.f32 %v410, %v433
      %v447 = vmul.f32 %v411, %v418
      %v448 = vmul.f32 %v412, %v423
      %v449 = vmul.f32 %v413, %v428
      %v450 = vmul.f32 %v414, %v433
      %452 = vset.pattern.permute.xlu0 0
      %453 = vperm.xlu0 %452, %v379
      %v454 = vpop.permute.xlu0 %453
      %457 = vset.pattern.permute.xlu0 0
      %458 = vperm.xlu0 %457, %v380
      %v459 = vpop.permute.xlu0 %458
      %462 = vset.pattern.permute.xlu0 0
      %463 = vperm.xlu0 %462, %v381
      %v464 = vpop.permute.xlu0 %463
      %467 = vset.pattern.permute.xlu0 0
      %468 = vperm.xlu0 %467, %v382
      %v469 = vpop.permute.xlu0 %468
      %v471 = vadd.f32 %v435, %v454
      %v472 = vadd.f32 %v436, %v459
      %v473 = vadd.f32 %v437, %v464
      %v474 = vadd.f32 %v438, %v469
      %v475 = vadd.f32 %v439, %v454
      %v476 = vadd.f32 %v440, %v459
      %v477 = vadd.f32 %v441, %v464
      %v478 = vadd.f32 %v442, %v469
      %v479 = vadd.f32 %v443, %v454
      %v480 = vadd.f32 %v444, %v459
      %v481 = vadd.f32 %v445, %v464
      %v482 = vadd.f32 %v446, %v469
      %v483 = vadd.f32 %v447, %v454
      %v484 = vadd.f32 %v448, %v459
      %v485 = vadd.f32 %v449, %v464
      %v486 = vadd.f32 %v450, %v469
      %487 = vst.msk [vmem:[%s208] sm:$0xff] %vm226, %v471
      %488 = vst.msk [vmem:[%s208 + $0x8] sm:$0xff] %vm226, %v472
      %489 = vst.msk [vmem:[%s208 + $0x10] sm:$0xff] %vm226, %v473
      %490 = vst.msk [vmem:[%s208 + $0x18] sm:$0xff] %vm226, %v474
      %491 = vst.msk [vmem:[%s208 + $0x20] sm:$0xff] %vm226, %v475
      %492 = vst.msk [vmem:[%s208 + $0x28] sm:$0xff] %vm226, %v476
      %493 = vst.msk [vmem:[%s208 + $0x30] sm:$0xff] %vm226, %v477
      %494 = vst.msk [vmem:[%s208 + $0x38] sm:$0xff] %vm226, %v478
      %495 = vst.msk [vmem:[%s208 + $0x40] sm:$0xff] %vm226, %v479
      %496 = vst.msk [vmem:[%s208 + $0x48] sm:$0xff] %vm226, %v480
      %497 = vst.msk [vmem:[%s208 + $0x50] sm:$0xff] %vm226, %v481
      %498 = vst.msk [vmem:[%s208 + $0x58] sm:$0xff] %vm226, %v482
      %499 = vst.msk [vmem:[%s208 + $0x60] sm:$0xff] %vm226, %v483
      %500 = vst.msk [vmem:[%s208 + $0x68] sm:$0xff] %vm226, %v484
      %501 = vst.msk [vmem:[%s208 + $0x70] sm:$0xff] %vm226, %v485
      %502 = vst.msk [vmem:[%s208 + $0x78] sm:$0xff] %vm226, %v486
      %s503 = smul.u32 4, %s18
      %p504 = scmp.lt.s32.totalorder %s503, 7
      %s505 = scalar_select %p504, %s503, 7
      %p506 = scmp.lt.s32.totalorder %s19, 0
      %s507 = scalar_select %p506, %s19, 0
      %s508 = smul.addr %s505, 4
      %s509 = sadd.s32 %s507, %s508
      %s510 = smul.addr %s509, 8
      %s511 = scalar_lea.vmem %s3, %s510
      // Predicated region
      $region33: #{tpu_custom_call.1} parent=31 // pred_check
        %p512 = pneg %p116
      $region34: #{tpu_custom_call.1} parent=31 // pred_check_branch
        %514 = sbr.rel (%p512) target = $region36
      $region35: #{tpu_custom_call.1} parent=31 // pred_region
        %s515 = smul.u32 4, %s18
      $region36: #{tpu_custom_call.1} parent=31 // pred_fallthru
        _
    $region32: #{tpu_custom_call.1} parent=5 // pred_fallthru
      _
    %p516 = scmp.le.s32.totalorder 2, %s9
    // Predicated region
    $region37: #{tpu_custom_call.1} parent=5 // pred_check
      %p517 = pneg %p516
    $region38: #{tpu_custom_call.1} parent=5 // pred_check_branch
      %519 = sbr.rel (%p517) target = $region40
    $region39: #{tpu_custom_call.1} parent=5 // pred_region
      %s520 = ssub.s32 %s9, 2
      // Predicated region
      $region41: #{tpu_custom_call.1} parent=39 // pred_check
        %p521 = pneg %p122
      $region42: #{tpu_custom_call.1} parent=39 // pred_check_branch
        %523 = sbr.rel (%p521) target = $region44
      $region43: #{tpu_custom_call.1} parent=39 // pred_region
        %s524 = smul.u32 4, %s20
        %p525 = scmp.lt.s32.totalorder %s524, 7
        %s526 = scalar_select %p525, %s524, 7
        %p527 = scmp.lt.s32.totalorder %s21, 0
        %s528 = scalar_select %p527, %s21, 0
        %s529 = smul.addr %s526, 4
        %s530 = sadd.s32 %s528, %s529
        %s531 = smul.addr %s530, 8
        %s532 = scalar_lea.vmem %s3, %s531
      $region44: #{tpu_custom_call.1} parent=39 // pred_fallthru
        _
    $region40: #{tpu_custom_call.1} parent=5 // pred_fallthru
      _
  $region6: #{tpu_custom_call.1} parent=0 // loop_footer
    %s13 = sadd.s32 1, %s9
  $region7: #{tpu_custom_call.1} parent=0 // loop_footer_branch
    %8 = sbr.rel target = $region3
  $region8: #{tpu_custom_call.1} parent=0 // loop_exit
    _

</llo_original>
